<compile_context>
chip_gen: v5e
topology: v5e:2x2
jax: 0.10.0
libtpu: 0.0.40
codegen_flags: <defaults>
</compile_context>

<pallas_src>
import numpy as np

import jax
import jax.numpy as jnp
from jax.experimental import pallas as pl
from jax.experimental.pallas import tpu as pltpu


# ---------------------------------------------------------------------------
# Tiling helpers
# ---------------------------------------------------------------------------

def _pick_block_rows(R, target=1024):
    """Largest row-block <= target that divides R (multiple of 8), else R."""
    if R <= target:
        return R
    for d in range(target, 7, -1):
        if R % d == 0 and d % 8 == 0:
            return d
    return R


def _pick_batch_chunk(N, H, target_rows=512):
    """Number of batch elements processed per node-kernel grid step."""
    if N * H <= target_rows:
        return N
    max_nb = max(1, min(N, target_rows // max(H, 1), 32))
    for nb in range(max_nb, 0, -1):
        if N % nb == 0 and (nb * H) % 8 == 0:
            return nb
    return N


# ---------------------------------------------------------------------------
# Pallas kernels
# ---------------------------------------------------------------------------

def _conv1x1_kernel(x_ref, w_ref, b_ref, o_ref):
    # x_ref: (blk, W*Cin) f32, w_ref: (W*Cin, W*Cout) bf16 block-diagonal,
    # b_ref: (1, W*Cout) f32 (bias tiled over W), o_ref: (blk, W*Cout) f32.
    y = jnp.dot(x_ref[...].astype(jnp.bfloat16), w_ref[...],
                preferred_element_type=jnp.float32)
    o_ref[...] = y + b_ref[...]


def _shift_rows(x, delta, nb, H):
    # y[n*H + h] = x[n*H + h + delta] if 0 <= h+delta < H else 0
    L = x.shape[1]
    zero_row = jnp.zeros((1, L), jnp.float32)
    parts = []
    for n in range(nb):
        xn = x[n * H:(n + 1) * H]
        if delta < 0:
            parts.append(jnp.concatenate([zero_row, xn[:H - 1]], axis=0))
        else:
            parts.append(jnp.concatenate([xn[1:], zero_row], axis=0))
    return parts[0] if nb == 1 else jnp.concatenate(parts, axis=0)


def _make_node_kernel(num_deps, nb, H):
    """Fused dep-sum + conv3x3(banded) + BN(inference) + ReLU."""

    def kernel(*refs):
        deps = refs[:num_deps]
        w_ref, scale_ref, shift_ref, o_ref = refs[num_deps:num_deps + 4]

        # Fused dependency sum (stays in VMEM, no extra HBM roundtrip).
        x = deps[0][...]
        for d in deps[1:]:
            x = x + d[...]

        # H-direction halo via in-register row shifts (zero rows at batch
        # boundaries).  W-direction taps/halo are folded into the band
        # matrices w_ref[0..2].
        x_up = _shift_rows(x, -1, nb, H)   # row h-1
        x_dn = _shift_rows(x, +1, nb, H)   # row h+1

        acc = jnp.dot(x_up.astype(jnp.bfloat16), w_ref[0],
                      preferred_element_type=jnp.float32)
        acc = acc + jnp.dot(x.astype(jnp.bfloat16), w_ref[1],
                            preferred_element_type=jnp.float32)
        acc = acc + jnp.dot(x_dn.astype(jnp.bfloat16), w_ref[2],
                            preferred_element_type=jnp.float32)

        # BN (folded scale/shift, pre-tiled over W) + ReLU, f32 epilogue.
        y = acc * scale_ref[...] + shift_ref[...]
        o_ref[...] = jnp.maximum(y, 0.0)

    return kernel


def _make_sum_kernel(num_inputs):
    def kernel(*refs):
        o_ref = refs[num_inputs]
        acc = refs[0][...]
        for r in refs[1:num_inputs]:
            acc = acc + r[...]
        o_ref[...] = acc
    return kernel


# ---------------------------------------------------------------------------
# pallas_call wrappers (lane-dense (N*H, W*C) slabs everywhere)
# ---------------------------------------------------------------------------

def conv1x1_dense(x_dense, w_band, b_tiled):
    R, Kin = x_dense.shape
    Lout = w_band.shape[1]
    blk = _pick_block_rows(R)
    return pl.pallas_call(
        _conv1x1_kernel,
        out_shape=jax.ShapeDtypeStruct((R, Lout), jnp.float32),
        grid=(R // blk,),
        in_specs=[
            pl.BlockSpec((blk, Kin), lambda i: (i, 0)),
            pl.BlockSpec((Kin, Lout), lambda i: (0, 0)),
            pl.BlockSpec((1, Lout), lambda i: (0, 0)),
        ],
        out_specs=pl.BlockSpec((blk, Lout), lambda i: (i, 0)),
        compiler_params=pltpu.CompilerParams(dimension_semantics=("parallel",)),
    )(x_dense, w_band, b_tiled)


def node_forward_dense(dep_tensors, w_band, scale_t, shift_t, N, H):
    R, L = dep_tensors[0].shape
    nb = _pick_batch_chunk(N, H)
    blk = nb * H
    kernel = _make_node_kernel(len(dep_tensors), nb, H)
    in_specs = [pl.BlockSpec((blk, L), lambda i: (i, 0)) for _ in dep_tensors]
    in_specs += [
        pl.BlockSpec((3, L, L), lambda i: (0, 0, 0)),
        pl.BlockSpec((1, L), lambda i: (0, 0)),
        pl.BlockSpec((1, L), lambda i: (0, 0)),
    ]
    return pl.pallas_call(
        kernel,
        out_shape=jax.ShapeDtypeStruct((R, L), jnp.float32),
        grid=(N // nb,),
        in_specs=in_specs,
        out_specs=pl.BlockSpec((blk, L), lambda i: (i, 0)),
        compiler_params=pltpu.CompilerParams(dimension_semantics=("parallel",)),
    )(*dep_tensors, w_band, scale_t, shift_t)


def fused_sum_dense(tensors):
    if len(tensors) == 1:
        return tensors[0]
    R, L = tensors[0].shape
    blk = _pick_block_rows(R)
    return pl.pallas_call(
        _make_sum_kernel(len(tensors)),
        out_shape=jax.ShapeDtypeStruct((R, L), jnp.float32),
        grid=(R // blk,),
        in_specs=[pl.BlockSpec((blk, L), lambda i: (i, 0)) for _ in tensors],
        out_specs=pl.BlockSpec((blk, L), lambda i: (i, 0)),
        compiler_params=pltpu.CompilerParams(dimension_semantics=("parallel",)),
    )(*tensors)


# ---------------------------------------------------------------------------
# Weight preparation (done once at init per spatial width W; host-side numpy)
# ---------------------------------------------------------------------------

def _band_conv3x3(w_hwio, W):
    """(3,3,Cin,Cout) conv weight -> (3, W*Cin, W*Cout) banded matrices."""
    Cin, Cout = w_hwio.shape[2], w_hwio.shape[3]
    out = np.zeros((3, W * Cin, W * Cout), np.float32)
    for dh in range(3):
        for dw in range(3):
            for wd in range(W):
                ws = wd + dw - 1
                if 0 <= ws < W:
                    out[dh, ws * Cin:(ws + 1) * Cin,
                        wd * Cout:(wd + 1) * Cout] = w_hwio[dh, dw]
    return out


def _block_diag(w, W):
    """(Cin, Cout) 1x1 weight -> (W*Cin, W*Cout) block-diagonal matrix."""
    Cin, Cout = w.shape
    out = np.zeros((W * Cin, W * Cout), np.float32)
    for i in range(W):
        out[i * Cin:(i + 1) * Cin, i * Cout:(i + 1) * Cout] = w
    return out


# ---------------------------------------------------------------------------
# Phase (mirrors the PyTorch module structure / dependency-graph logic)
# ---------------------------------------------------------------------------

def build_dependency_graph(gene):
    graph = {}
    residual = gene[-1][0] == 1
    graph[1] = []
    for i in range(len(gene) - 1):
        graph[i + 2] = [j + 1 for j in range(len(gene[i])) if gene[i][j] == 1]
    graph[len(gene) + 1] = [0] if residual else []
    no_inputs = []
    no_outputs = []
    for i in range(1, len(gene) + 1):
        if len(graph[i]) == 0:
            no_inputs.append(i)
        has_output = False
        for j in range(i + 1, len(gene) + 2):
            if i in graph[j]:
                has_output = True
                break
        if not has_output:
            no_outputs.append(i)
    for node in no_outputs:
        if node not in no_inputs:
            graph[len(gene) + 1].append(node)
    for node in no_inputs:
        if node not in no_outputs:
            graph[node].append(0)
    return graph


class PhasePallas:
    def __init__(self, gene, in_channels, out_channels, key):
        self.gene = gene
        self.in_channels = in_channels
        self.out_channels = out_channels
        self.dependency_graph = build_dependency_graph(gene)
        self.all_zeros = sum(sum(t) for t in gene[:-1]) == 0
        self.residual = gene[-1][0] == 1
        self.num_nodes = len(gene)

        eps = 1e-5
        keys = jax.random.split(key, 2 + 5 * len(gene))
        # conv1x1 parameters (PyTorch Conv2d(k=1) has bias by default).
        self.w1 = 0.1 * jax.random.normal(
            keys[0], (in_channels, out_channels), jnp.float32)
        self.b1 = 0.1 * jax.random.normal(
            keys[1], (out_channels,), jnp.float32)

        # Node parameters: 3x3 conv (HWIO, no bias) + BN folded scale/shift.
        self.node_raw = []
        for i in range(len(gene)):
            kw, kg, kb, km, kv = keys[2 + 5 * i: 7 + 5 * i]
            w = 0.1 * jax.random.normal(
                kw, (3, 3, out_channels, out_channels), jnp.float32)
            gamma = 1.0 + 0.1 * jax.random.normal(kg, (out_channels,), jnp.float32)
            beta = 0.1 * jax.random.normal(kb, (out_channels,), jnp.float32)
            mean = 0.1 * jax.random.normal(km, (out_channels,), jnp.float32)
            var = jnp.abs(jax.random.normal(kv, (out_channels,), jnp.float32)) + 0.5
            scale = gamma / jnp.sqrt(var + eps)
            shift = beta - mean * scale
            self.node_raw.append((w, scale, shift))

        self._prepared = {}  # W -> lane-dense weight bundle

    def _prepare(self, W):
        if W in self._prepared:
            return self._prepared[W]
        Cout = self.out_channels
        p = {
            "w1_band": jnp.asarray(_block_diag(np.asarray(self.w1), W),
                                   jnp.bfloat16),
            "b1_t": jnp.asarray(
                np.tile(np.asarray(self.b1), W).reshape(1, W * Cout),
                jnp.float32),
            "nodes": [],
        }
        for (w, scale, shift) in self.node_raw:
            wb = jnp.asarray(_band_conv3x3(np.asarray(w), W), jnp.bfloat16)
            sc = jnp.asarray(np.tile(np.asarray(scale), W).reshape(1, W * Cout),
                             jnp.float32)
            sh = jnp.asarray(np.tile(np.asarray(shift), W).reshape(1, W * Cout),
                             jnp.float32)
            p["nodes"].append((wb, sc, sh))
        self._prepared[W] = p
        return p

    def _to_nchw(self, dense, N, H, W):
        C = self.out_channels
        return jnp.transpose(dense.reshape(N, H, W, C), (0, 3, 1, 2))

    def __call__(self, x_nchw):
        N, Cin, H, W = x_nchw.shape
        assert Cin == self.in_channels
        p = self._prepare(W)

        # NCHW -> lane-dense (N*H, W*Cin) slab (contiguous NHWC flattening).
        x_dense = jnp.transpose(x_nchw.astype(jnp.float32),
                                (0, 2, 3, 1)).reshape(N * H, W * Cin)

        y0 = conv1x1_dense(x_dense, p["w1_band"], p["b1_t"])
        if self.all_zeros:
            return self._to_nchw(y0, N, H, W)

        outputs = [y0]
        for i in range(1, self.num_nodes + 1):
            if not self.dependency_graph[i]:
                outputs.append(None)
            else:
                deps = [outputs[j] for j in self.dependency_graph[i]]
                wb, sc, sh = p["nodes"][i - 1]
                outputs.append(node_forward_dense(deps, wb, sc, sh, N, H))

        final_deps = [outputs[j]
                      for j in self.dependency_graph[self.num_nodes + 1]]
        out_dense = fused_sum_dense(final_deps)
        return self._to_nchw(out_dense, N, H, W)


# ---------------------------------------------------------------------------
# Pure-JAX reference (f32) for a correctness sanity check
# ---------------------------------------------------------------------------

def phase_reference(phase, x_nchw):
    x = jnp.transpose(x_nchw.astype(jnp.float32), (0, 2, 3, 1))
    y0 = jnp.einsum("nhwc,co->nhwo", x, phase.w1) + phase.b1
    if phase.all_zeros:
        return jnp.transpose(y0, (0, 3, 1, 2))
    outputs = [y0]
    for i in range(1, phase.num_nodes + 1):
        deps = phase.dependency_graph[i]
        if not deps:
            outputs.append(None)
            continue
        xin = outputs[deps[0]]
        for j in deps[1:]:
            xin = xin + outputs[j]
        w, scale, shift = phase.node_raw[i - 1]
        y = jax.lax.conv_general_dilated(
            xin, w, window_strides=(1, 1), padding="SAME",
            dimension_numbers=("NHWC", "HWIO", "NHWC"))
        y = y * scale.reshape(1, 1, 1, -1) + shift.reshape(1, 1, 1, -1)
        outputs.append(jnp.maximum(y, 0.0))
    fdeps = phase.dependency_graph[phase.num_nodes + 1]
    out = outputs[fdeps[0]]
    for j in fdeps[1:]:
        out = out + outputs[j]
    return jnp.transpose(out, (0, 3, 1, 2))


# ---------------------------------------------------------------------------

if __name__ == "__main__":
    key = jax.random.PRNGKey(0)
    k_x, k_p = jax.random.split(key)

    # gene: node2<-node1, node3<-node2, residual bit = 1
    gene = [[1], [0, 1], [1]]
    in_channels, out_channels = 4, 8
    N, H, W = 2, 16, 16

    x = jax.random.normal(k_x, (N, in_channels, H, W), jnp.float32)  # NCHW
    phase = PhasePallas(gene, in_channels, out_channels, k_p)

    out = jax.block_until_ready(phase(x))
    assert out.shape == (N, out_channels, H, W)
    assert bool(jnp.all(jnp.isfinite(out)))

    ref = jax.block_until_ready(phase_reference(phase, x))
    max_err = float(jnp.max(jnp.abs(out - ref)))
    assert max_err < 1e-1, f"max abs error vs reference: {max_err}"

    print("KERNEL_OK")
</pallas_src>

<mosaic_0001>
module attributes {stable_mosaic.version = 11 : i64} {
  func.func @_conv1x1_kernel(%arg0: i32, %arg1: memref<32x64xf32, #tpu.memory_space<vmem>>, %arg2: memref<64x128xbf16, #tpu.memory_space<vmem>>, %arg3: memref<1x128xf32, #tpu.memory_space<vmem>>, %arg4: memref<32x128xf32, #tpu.memory_space<vmem>>) attributes {dimension_semantics = [#tpu.dimension_semantics<parallel>], iteration_bounds = array<i64: 1>, scalar_prefetch = 0 : i64, scratch_operands = 0 : i64, tpu.core_type = #tpu.core_type<tc>, window_params = [{transform_indices = @transform_0, window_bounds = array<i64: 32, 64>}, {pipeline_mode = #tpu.pipeline_mode<synchronous>, transform_indices = @transform_1, window_bounds = array<i64: 64, 128>}, {pipeline_mode = #tpu.pipeline_mode<synchronous>, transform_indices = @transform_2, window_bounds = array<i64: 1, 128>}, {transform_indices = @transform_3, window_bounds = array<i64: 32, 128>}]} {
    %c0 = arith.constant 0 : index
    %c0_0 = arith.constant 0 : index
    %0 = vector.load %arg1[%c0, %c0_0] : memref<32x64xf32, #tpu.memory_space<vmem>>, vector<32x64xf32>
    %1 = arith.truncf %0 : vector<32x64xf32> to vector<32x64xbf16>
    %c0_1 = arith.constant 0 : index
    %c0_2 = arith.constant 0 : index
    %2 = vector.load %arg2[%c0_1, %c0_2] : memref<64x128xbf16, #tpu.memory_space<vmem>>, vector<64x128xbf16>
    %cst = arith.constant dense<0.000000e+00> : vector<32x128xf32>
    %3 = tpu.matmul %1, %2, %cst {dimension_numbers = #tpu.dot_dimension_numbers<[1], [0], [0], [1], [0, 0, 1, 1], [], []>} : vector<32x64xbf16>, vector<64x128xbf16>, vector<32x128xf32> -> vector<32x128xf32>
    %c0_3 = arith.constant 0 : index
    %c0_4 = arith.constant 0 : index
    %4 = vector.load %arg3[%c0_3, %c0_4] : memref<1x128xf32, #tpu.memory_space<vmem>>, vector<1x128xf32>
    %5 = vector.broadcast %4 : vector<1x128xf32> to vector<32x128xf32>
    %6 = arith.addf %3, %5 : vector<32x128xf32>
    %c0_5 = arith.constant 0 : index
    %c0_6 = arith.constant 0 : index
    %7 = vector.load %arg4[%c0_5, %c0_6] : memref<32x128xf32, #tpu.memory_space<vmem>>, vector<32x128xf32>
    tpu.vector_store %arg4[%c0_5, %c0_6], %6 {strides = array<i32>} : memref<32x128xf32, #tpu.memory_space<vmem>>, vector<32x128xf32>,
    return
  }
  func.func @transform_0(%arg0: i32) -> (i32, i32) {
    %c0_i32 = arith.constant 0 : i32
    %c0_i32_0 = arith.constant 0 : i32
    return %arg0, %c0_i32 : i32, i32
  }
  func.func @transform_1(%arg0: i32) -> (i32, i32) {
    %c0_i32 = arith.constant 0 : i32
    %c0_i32_0 = arith.constant 0 : i32
    %c0_i32_1 = arith.constant 0 : i32
    return %c0_i32, %c0_i32_0 : i32, i32
  }
  func.func @transform_2(%arg0: i32) -> (i32, i32) {
    %c0_i32 = arith.constant 0 : i32
    %c0_i32_0 = arith.constant 0 : i32
    %c0_i32_1 = arith.constant 0 : i32
    return %c0_i32, %c0_i32_0 : i32, i32
  }
  func.func @transform_3(%arg0: i32) -> (i32, i32) {
    %c0_i32 = arith.constant 0 : i32
    %c0_i32_0 = arith.constant 0 : i32
    return %arg0, %c0_i32 : i32, i32
  }
}

</mosaic_0001>

<llo_original>
// kernel: tpu_custom_call.1
$region0: #{tpu_custom_call.1}
  #allocation0 [shape = 'u32[]', space=smem, size = 0x4, offset = 0x4, fixed_abs, tag = 'smem constant byte address 0x4 - core index']
  #allocation1 [shape = 'u32[72,128]{1,0:T(1,128)}', space=vmem, size = 0x9000, scoped, tag = 'internal scratch']
  %s0 = inlined_call_operand.hbm [shape: f32[32,64], index: 0, kind: input, shape index: {}]
  %s1 = inlined_call_operand.hbm [shape: bf16[64,128], index: 1, kind: input, shape index: {}]
  %s2 = inlined_call_operand.vmem [shape: f32[1,128], index: 2, kind: input, shape index: {}]
  %s3 = inlined_call_operand.hbm [shape: f32[32,128], index: 3, kind: output, shape index: {}]
  %s4 = sld [smem:[#allocation0]]
  $region30: #{tpu_custom_call.1} parent=0
    _
  %s6 = ssub.s32 1, %s4
  %s7 = scalar_select 0, %s6, %s4
  $region1: #{tpu_custom_call.1} parent=0
    #allocation2 [shape = 'u8[16384]{0}', space=vmem, size = 0x4000, scoped, tag = 'input window, operand 0, single buffered']
    #allocation3 [shape = 's32[1]{0}', space=sflag, size = 0x4, scoped, tag = 'scoped memory for tpu_custom_call.1']
    #allocation4 [shape = 's32[1]{0}', space=sflag, size = 0x4, scoped, tag = 'scoped memory for tpu_custom_call.1']
    #allocation5 [shape = 'u8[16384]{0}', space=vmem, size = 0x4000, scoped, tag = 'input window, operand 1, single buffered']
    #allocation6 [shape = 's32[1]{0}', space=sflag, size = 0x4, scoped, tag = 'scoped memory for tpu_custom_call.1']
    #allocation7 [shape = 'u8[16384]{0}', space=vmem, size = 0x4000, scoped, tag = 'output window, operand 0, single buffered']
    %8 = vsyncpa [#allocation3], 0
    %9 = vsyncpa [#allocation6], 0
    %10 = vsyncpa [#allocation4], 0
    // Predicated region
    $region2: #{tpu_custom_call.1} parent=1 // pred_check
      _
    $region3: #{tpu_custom_call.1} parent=1 // pred_check_branch
      %12 = sbr.rel (0) target = $region5
    $region4: #{tpu_custom_call.1} parent=1 // pred_region
      %14 = vsyncadd [#allocation3], 0
      %s15 = sshll.u32 %s0, 4
      %s16 = int_to_ptr.hbm [resolvable:$true] %s15
      %s17 = sshll.u32 [#allocation2], 4
      %s18 = int_to_ptr.vmem [resolvable:$true] %s17
      %23 = dma.hbm_to_vmem [thread:$0]  %s16, 512, %s18, [#allocation3], 128, 128, 8
    $region5: #{tpu_custom_call.1} parent=1 // pred_fallthru
      _
    // Predicated region
    $region6: #{tpu_custom_call.1} parent=1 // pred_check
      _
    $region7: #{tpu_custom_call.1} parent=1 // pred_check_branch
      %25 = sbr.rel (0) target = $region9
    $region8: #{tpu_custom_call.1} parent=1 // pred_region
      %27 = vsyncadd [#allocation6], 0
      %s28 = sshll.u32 %s1, 4
      %s29 = int_to_ptr.hbm [resolvable:$true] %s28
      %s30 = sshll.u32 [#allocation5], 4
      %s31 = int_to_ptr.vmem [resolvable:$true] %s30
      %36 = dma.hbm_to_vmem [thread:$0]  %s29, 512, %s31, [#allocation6], 64, 64, 4
    $region9: #{tpu_custom_call.1} parent=1 // pred_fallthru
      _
    // Predicated region
    $region10: #{tpu_custom_call.1} parent=1 // pred_check
      _
    $region11: #{tpu_custom_call.1} parent=1 // pred_check_branch
      %38 = sbr.rel (0) target = $region13
    $region12: #{tpu_custom_call.1} parent=1 // pred_region
      _
    $region13: #{tpu_custom_call.1} parent=1 // pred_fallthru
      _
    // Predicated region
    $region14: #{tpu_custom_call.1} parent=1 // pred_check
      _
    $region15: #{tpu_custom_call.1} parent=1 // pred_check_branch
      %40 = sbr.rel (0) target = $region17
    $region16: #{tpu_custom_call.1} parent=1 // pred_region
      %42 = dma.done [#allocation3], 512
    $region17: #{tpu_custom_call.1} parent=1 // pred_fallthru
      _
    // Predicated region
    $region18: #{tpu_custom_call.1} parent=1 // pred_check
      _
    $region19: #{tpu_custom_call.1} parent=1 // pred_check_branch
      %44 = sbr.rel (0) target = $region21
    $region20: #{tpu_custom_call.1} parent=1 // pred_region
      %46 = dma.done [#allocation6], 512
    $region21: #{tpu_custom_call.1} parent=1 // pred_fallthru
      _
    %v48 = vld [vmem:[#allocation2] sm:$0xff]
    %v49 = vld [vmem:[#allocation2 + $0x8] sm:$0xff]
    %v50 = vld [vmem:[#allocation2 + $0x10] sm:$0xff]
    %v51 = vld [vmem:[#allocation2 + $0x18] sm:$0xff]
    %v52 = vpack.c.bf16 %v49, %v48
    %v53 = vpack.c.bf16 %v51, %v50
    %v54 = vld [vmem:[#allocation5] sm:$0xf]
    %v55 = vld [vmem:[#allocation5 + $0x4] sm:$0xf]
    %v56 = vld [vmem:[#allocation5 + $0x8] sm:$0xf]
    %v57 = vld [vmem:[#allocation5 + $0xc] sm:$0xf]
    %v58 = vld [vmem:[#allocation5 + $0x10] sm:$0xf]
    %v59 = vld [vmem:[#allocation5 + $0x14] sm:$0xf]
    %v60 = vld [vmem:[#allocation5 + $0x18] sm:$0xf]
    %v61 = vld [vmem:[#allocation5 + $0x1c] sm:$0xf]
    %v62 = vld [vmem:[%s2] sm:$0x1]
    %v64 = vperm.slane %v62, 0
    %v74 = vunpack.c.l.b16 %v54
    %v75 = vunpack.c.l.b16 %v55
    %v76 = vunpack.c.l.b16 %v56
    %v77 = vunpack.c.l.b16 %v57
    %v78 = vunpack.c.l.b16 %v58
    %v79 = vunpack.c.l.b16 %v59
    %v80 = vunpack.c.l.b16 %v60
    %v81 = vunpack.c.l.b16 %v61
    %v82 = vpack.c.b16 %v75, %v74
    %v83 = vpack.c.b16 %v77, %v76
    %v84 = vpack.c.b16 %v79, %v78
    %v85 = vpack.c.b16 %v81, %v80
    %vm90 = vcmask 523264
    %v92 = vsel %vm90, %v52, 0
    %v95 = vsel %vm90, %v53, 0
    %97 = vmatpush.bf16.msra.mxu0 0
    %98 = vmatpush.bf16.msra.mxu0 0
    %99 = vmatpush.bf16.msra.mxu0 0
    %100 = vmatpush.bf16.msra.mxu0 0
    %101 = vmatpush.bf16.msra.mxu0 %v85
    %102 = vmatpush.bf16.msra.mxu0 %v84
    %103 = vmatpush.bf16.msra.mxu0 %v83
    %104 = vmatpush.bf16.msra.mxu0 %v82
    %105 = vmatmul.bf16.gmra.mxu0 %v92
    %v106 = vpop.f32.mrf.mxu0
    %v107 = vadd.f32 %v64, %v106
    %v108 = vpop.f32.mrf.mxu0
    %v109 = vadd.f32 %v64, %v108
    %110 = vmatmul.bf16.gmra.mxu0 %v95
    %v111 = vpop.f32.mrf.mxu0
    %v112 = vadd.f32 %v64, %v111
    %v113 = vpop.f32.mrf.mxu0
    %v114 = vadd.f32 %v64, %v113
    %115 = vdwg.mxu0
    %116 = vst [vmem:[#allocation7] sm:$0xff] %v107
    %117 = vst [vmem:[#allocation7 + $0x8] sm:$0xff] %v109
    %118 = vst [vmem:[#allocation7 + $0x10] sm:$0xff] %v112
    %119 = vst [vmem:[#allocation7 + $0x18] sm:$0xff] %v114
    // Predicated region
    $region22: #{tpu_custom_call.1} parent=1 // pred_check
      _
    $region23: #{tpu_custom_call.1} parent=1 // pred_check_branch
      %121 = sbr.rel (0) target = $region25
    $region24: #{tpu_custom_call.1} parent=1 // pred_region
      %123 = vsyncadd [#allocation4], 0
      %s124 = sshll.u32 [#allocation7], 4
      %s125 = int_to_ptr.vmem [resolvable:$true] %s124
      %s126 = sshll.u32 %s3, 4
      %s127 = int_to_ptr.hbm [resolvable:$true] %s126
      %132 = dma.vmem_to_hbm [thread:$0]  %s125, 512, %s127, [#allocation4], 128, 128, 8
    $region25: #{tpu_custom_call.1} parent=1 // pred_fallthru
      _
    // Predicated region
    $region26: #{tpu_custom_call.1} parent=1 // pred_check
      _
    $region27: #{tpu_custom_call.1} parent=1 // pred_check_branch
      %134 = sbr.rel (0) target = $region29
    $region28: #{tpu_custom_call.1} parent=1 // pred_region
      %136 = dma.done [#allocation4], 512
    $region29: #{tpu_custom_call.1} parent=1 // pred_fallthru
      _
    %137 = vsyncpa [#allocation3], 1
    %138 = vsyncpa [#allocation6], 1
    %139 = vsyncpa [#allocation4], 1

</llo_original>
